<compile_context>
chip_gen: v6e
topology: v6e:2x2x1
jax: 0.10.0
libtpu: 0.0.40
codegen_flags: <defaults>
</compile_context>

<pallas_src>
import functools

import jax
import jax.numpy as jnp
from jax import lax
from jax.experimental import pallas as pl
from jax.experimental.pallas import tpu as pltpu


def _rnn_kernel(x_ref, wih_ref, whh_ref, b_ref, wfc_ref, bfc_ref,
                o_ref, h_scratch, pre_scratch, *, t_pad, unroll):
    """One grid step == one (batch_tile, time_chunk) slab.

    x_ref      : (Tc, Bt, Dp)  bf16 time-major chunk
    wih_ref    : (Dp, Hp)      bf16
    whh_ref    : (Hp, Hp)      bf16
    b_ref      : (1, Hp)       f32  (b_ih + b_hh, zero-padded)
    wfc_ref    : (Hp, Cp)      bf16
    bfc_ref    : (1, Cp)       f32  (padded classes get -1e9)
    o_ref      : (Bt, Cp)      f32  resident across the time axis
    h_scratch  : (Bt, Hp)      f32  hidden state carried across time chunks
    pre_scratch: (Tc, Bt, Hp)  f32  hoisted input projection for this chunk
    t_pad      : static int    number of zero-padded timesteps at the front
    """
    tc = pl.program_id(1)

    @pl.when(tc == 0)
    def _():
        h_scratch[...] = jnp.zeros_like(h_scratch)

    Tc, Bt, Dp = x_ref.shape
    Hp = h_scratch.shape[1]

    # Hoisted input projection: ONE big MXU matmul per chunk, bias added once.
    xr = x_ref[...].reshape(Tc * Bt, Dp)
    pre = jnp.dot(xr, wih_ref[...],
                  preferred_element_type=jnp.float32) + b_ref[...]
    pre_scratch[...] = pre.reshape(Tc, Bt, Hp)

    whh = whh_ref[...]
    t0 = tc * Tc  # global time index of the first step of this chunk

    # Serial recurrence: only h @ W_hh is on the critical path.
    def step(t, h):
        z = pre_scratch[t] + jnp.dot(h.astype(whh.dtype), whh,
                                     preferred_element_type=jnp.float32)
        h_new = jnp.tanh(z)
        if t_pad:  # static: only emit the select if padding actually exists
            h_new = jnp.where(t0 + t >= t_pad, h_new, h)
        return h_new

    h = lax.fori_loop(0, Tc, step, h_scratch[...], unroll=unroll)
    h_scratch[...] = h

    @pl.when(tc == pl.num_programs(1) - 1)
    def _():
        logits = (jnp.dot(h.astype(wfc_ref.dtype), wfc_ref[...],
                          preferred_element_type=jnp.float32)
                  + bfc_ref[...])
        m = jnp.max(logits, axis=1, keepdims=True)
        e = jnp.exp(logits - m)
        denom = jnp.sum(e, axis=1, keepdims=True)
        o_ref[...] = (e * pl.reciprocal(denom, approx=True)).astype(o_ref.dtype)


def _round_up(v, m):
    return ((v + m - 1) // m) * m


def text_rnn_forward(x, w_ih, w_hh, b_ih, b_hh, w_fc, b_fc,
                     *, time_chunk=128, batch_tile=128):
    """x: (B, T, D) float32 (PyTorch batch_first convention).

    Weights use PyTorch shapes:
      w_ih (H, D), w_hh (H, H), b_ih (H,), b_hh (H,), w_fc (C, H), b_fc (C,)
    Returns softmax probabilities (B, C) in float32.
    """
    B, T, D = x.shape
    H = w_ih.shape[0]
    C = w_fc.shape[0]
    f32, bf16 = jnp.float32, jnp.bfloat16

    # Lane padding to 128; batch padding to a multiple of 16 (bf16 sublane tile).
    Dp = _round_up(D, 128)
    Hp = _round_up(H, 128)
    Cp = _round_up(C, 128)
    Bt = min(_round_up(batch_tile, 16), _round_up(B, 16))
    Bp = _round_up(B, Bt)

    # Balanced time chunks: padding is < n_tc steps and Tc never degenerates.
    n_tc = pl.cdiv(T, time_chunk)
    Tc = -(-T // n_tc)
    Tp = n_tc * Tc
    t_pad = Tp - T  # zero-padded steps at the FRONT, masked in-kernel

    # --- layout prep (plain JAX glue): time-major, padded, MXU-ready bf16 ---
    x_tbd = jnp.transpose(x, (1, 0, 2)).astype(bf16)                 # (T, B, D)
    x_p = jnp.zeros((Tp, Bp, Dp), bf16).at[t_pad:, :B, :D].set(x_tbd)
    wih_p = jnp.zeros((Dp, Hp), bf16).at[:D, :H].set(w_ih.T.astype(bf16))
    whh_p = jnp.zeros((Hp, Hp), bf16).at[:H, :H].set(w_hh.T.astype(bf16))
    b_p = jnp.zeros((1, Hp), f32).at[0, :H].set((b_ih + b_hh).astype(f32))
    wfc_p = jnp.zeros((Hp, Cp), bf16).at[:H, :C].set(w_fc.T.astype(bf16))
    # Padded classes get a huge negative bias so the in-kernel softmax ignores them.
    bfc_p = jnp.full((1, Cp), -1e9, f32).at[0, :C].set(b_fc.astype(f32))

    unroll = True if Tc <= 16 else 8

    grid_spec = pltpu.PrefetchScalarGridSpec(
        num_scalar_prefetch=0,
        grid=(Bp // Bt, n_tc),
        in_specs=[
            pl.BlockSpec((Tc, Bt, Dp), lambda b, t: (t, b, 0)),   # x chunk
            pl.BlockSpec((Dp, Hp), lambda b, t: (0, 0)),          # W_ih
            pl.BlockSpec((Hp, Hp), lambda b, t: (0, 0)),          # W_hh
            pl.BlockSpec((1, Hp), lambda b, t: (0, 0)),           # b_ih + b_hh
            pl.BlockSpec((Hp, Cp), lambda b, t: (0, 0)),          # W_fc
            pl.BlockSpec((1, Cp), lambda b, t: (0, 0)),           # b_fc
        ],
        out_specs=pl.BlockSpec((Bt, Cp), lambda b, t: (b, 0)),
        scratch_shapes=[
            pltpu.VMEM((Bt, Hp), f32),        # hidden state
            pltpu.VMEM((Tc, Bt, Hp), f32),    # hoisted input projection
        ],
    )

    out_padded = pl.pallas_call(
        functools.partial(_rnn_kernel, t_pad=t_pad, unroll=unroll),
        out_shape=jax.ShapeDtypeStruct((Bp, Cp), f32),
        grid_spec=grid_spec,
        compiler_params=pltpu.CompilerParams(
            dimension_semantics=("parallel", "arbitrary"),
            vmem_limit_bytes=48 * 1024 * 1024),
    )(x_p, wih_p, whh_p, b_p, wfc_p, bfc_p)

    return out_padded[:B, :C]


def _reference(x, w_ih, w_hh, b_ih, b_hh, w_fc, b_fc):
    """Pure-JAX f32 reference mirroring torch semantics."""
    B, T, D = x.shape
    H = w_ih.shape[0]
    h = jnp.zeros((B, H), jnp.float32)
    for t in range(T):
        h = jnp.tanh(x[:, t, :] @ w_ih.T + b_ih + h @ w_hh.T + b_hh)
    logits = h @ w_fc.T + b_fc
    return jax.nn.softmax(logits, axis=1)


if __name__ == "__main__":
    # Small deterministic shapes consistent with the module.
    B, T, D, H, C = 2, 8, 16, 32, 8

    key = jax.random.PRNGKey(0)
    ks = jax.random.split(key, 7)
    scale = 1.0 / jnp.sqrt(H)
    x = jax.random.normal(ks[0], (B, T, D), jnp.float32)
    w_ih = jax.random.uniform(ks[1], (H, D), jnp.float32, -scale, scale)
    w_hh = jax.random.uniform(ks[2], (H, H), jnp.float32, -scale, scale)
    b_ih = jax.random.uniform(ks[3], (H,), jnp.float32, -scale, scale)
    b_hh = jax.random.uniform(ks[4], (H,), jnp.float32, -scale, scale)
    w_fc = jax.random.uniform(ks[5], (C, H), jnp.float32, -scale, scale)
    b_fc = jax.random.uniform(ks[6], (C,), jnp.float32, -scale, scale)

    out = text_rnn_forward(x, w_ih, w_hh, b_ih, b_hh, w_fc, b_fc)
    out = jax.block_until_ready(out)

    ref = _reference(x, w_ih, w_hh, b_ih, b_hh, w_fc, b_fc)
    assert out.shape == (B, C)
    # bf16 MXU operands + approx reciprocal -> loosened tolerance vs f32 ref.
    assert jnp.allclose(out, ref, atol=2e-2, rtol=2e-2), "mismatch vs reference"
    assert jnp.allclose(jnp.sum(out, axis=1), 1.0, atol=5e-3)

    print("KERNEL_OK")
</pallas_src>

<mosaic_0001>
module attributes {stable_mosaic.version = 11 : i64} {
  func.func @_rnn_kernel(%arg0: i32, %arg1: i32, %arg2: memref<8x16x128xbf16, #tpu.memory_space<vmem>>, %arg3: memref<128x128xbf16, #tpu.memory_space<vmem>>, %arg4: memref<128x128xbf16, #tpu.memory_space<vmem>>, %arg5: memref<1x128xf32, #tpu.memory_space<vmem>>, %arg6: memref<128x128xbf16, #tpu.memory_space<vmem>>, %arg7: memref<1x128xf32, #tpu.memory_space<vmem>>, %arg8: memref<16x128xf32, #tpu.memory_space<vmem>>, %arg9: memref<16x128xf32, #tpu.memory_space<vmem>>, %arg10: memref<8x16x128xf32, #tpu.memory_space<vmem>>) attributes {dimension_semantics = [#tpu.dimension_semantics<parallel>, #tpu.dimension_semantics<arbitrary>], iteration_bounds = array<i64: 1, 1>, scalar_prefetch = 0 : i64, scratch_operands = 2 : i64, tpu.core_type = #tpu.core_type<tc>, window_params = [{transform_indices = @transform_0, window_bounds = array<i64: 8, 16, 128>}, {pipeline_mode = #tpu.pipeline_mode<synchronous>, transform_indices = @transform_1, window_bounds = array<i64: 128, 128>}, {pipeline_mode = #tpu.pipeline_mode<synchronous>, transform_indices = @transform_2, window_bounds = array<i64: 128, 128>}, {pipeline_mode = #tpu.pipeline_mode<synchronous>, transform_indices = @transform_3, window_bounds = array<i64: 1, 128>}, {pipeline_mode = #tpu.pipeline_mode<synchronous>, transform_indices = @transform_4, window_bounds = array<i64: 128, 128>}, {pipeline_mode = #tpu.pipeline_mode<synchronous>, transform_indices = @transform_5, window_bounds = array<i64: 1, 128>}, {transform_indices = @transform_6, window_bounds = array<i64: 16, 128>}]} {
    %c0_i32 = arith.constant 0 : i32
    %0 = arith.cmpi eq, %arg1, %c0_i32 : i32
    %1 = arith.extui %0 : i1 to i32
    %c0_i32_0 = arith.constant 0 : i32
    %2 = arith.cmpi ne, %1, %c0_i32_0 : i32
    scf.if %2 {
      %cst_43 = arith.constant 0.000000e+00 : f32
      %74 = vector.broadcast %cst_43 : f32 to vector<16x128xf32>
      %c0_44 = arith.constant 0 : index
      %c0_45 = arith.constant 0 : index
      %75 = vector.load %arg9[%c0_44, %c0_45] : memref<16x128xf32, #tpu.memory_space<vmem>>, vector<16x128xf32>
      tpu.vector_store %arg9[%c0_44, %c0_45], %74 {strides = array<i32>} : memref<16x128xf32, #tpu.memory_space<vmem>>, vector<16x128xf32>,
    } else {
    }
    %c0 = arith.constant 0 : index
    %c0_1 = arith.constant 0 : index
    %c0_2 = arith.constant 0 : index
    %3 = vector.load %arg2[%c0, %c0_1, %c0_2] : memref<8x16x128xbf16, #tpu.memory_space<vmem>>, vector<8x16x128xbf16>
    %4 = vector.shape_cast %3 : vector<8x16x128xbf16> to vector<128x128xbf16>
    %c0_3 = arith.constant 0 : index
    %c0_4 = arith.constant 0 : index
    %5 = vector.load %arg3[%c0_3, %c0_4] : memref<128x128xbf16, #tpu.memory_space<vmem>>, vector<128x128xbf16>
    %cst = arith.constant dense<0.000000e+00> : vector<128x128xf32>
    %6 = tpu.matmul %4, %5, %cst {dimension_numbers = #tpu.dot_dimension_numbers<[1], [0], [0], [1], [0, 0, 1, 1], [], []>} : vector<128x128xbf16>, vector<128x128xbf16>, vector<128x128xf32> -> vector<128x128xf32>
    %c0_5 = arith.constant 0 : index
    %c0_6 = arith.constant 0 : index
    %7 = vector.load %arg5[%c0_5, %c0_6] : memref<1x128xf32, #tpu.memory_space<vmem>>, vector<1x128xf32>
    %8 = vector.broadcast %7 : vector<1x128xf32> to vector<128x128xf32>
    %9 = arith.addf %6, %8 : vector<128x128xf32>
    %10 = vector.shape_cast %9 : vector<128x128xf32> to vector<8x16x128xf32>
    %c0_7 = arith.constant 0 : index
    %c0_8 = arith.constant 0 : index
    %c0_9 = arith.constant 0 : index
    %11 = vector.load %arg10[%c0_7, %c0_8, %c0_9] : memref<8x16x128xf32, #tpu.memory_space<vmem>>, vector<8x16x128xf32>
    tpu.vector_store %arg10[%c0_7, %c0_8, %c0_9], %10 {strides = array<i32>} : memref<8x16x128xf32, #tpu.memory_space<vmem>>, vector<8x16x128xf32>,
    %c0_10 = arith.constant 0 : index
    %c0_11 = arith.constant 0 : index
    %12 = vector.load %arg4[%c0_10, %c0_11] : memref<128x128xbf16, #tpu.memory_space<vmem>>, vector<128x128xbf16>
    %c0_12 = arith.constant 0 : index
    %c0_13 = arith.constant 0 : index
    %13 = vector.load %arg9[%c0_12, %c0_13] : memref<16x128xf32, #tpu.memory_space<vmem>>, vector<16x128xf32>
    %c0_i32_14 = arith.constant 0 : i32
    %14 = arith.index_cast %c0_i32_14 : i32 to index
    %c0_15 = arith.constant 0 : index
    %c0_16 = arith.constant 0 : index
    %15 = vector.load %arg10[%14, %c0_15, %c0_16] : memref<8x16x128xf32, #tpu.memory_space<vmem>>, vector<1x16x128xf32>
    %16 = vector.shape_cast %15 : vector<1x16x128xf32> to vector<16x128xf32>
    %17 = arith.truncf %13 : vector<16x128xf32> to vector<16x128xbf16>
    %cst_17 = arith.constant dense<0.000000e+00> : vector<16x128xf32>
    %18 = tpu.matmul %17, %12, %cst_17 {dimension_numbers = #tpu.dot_dimension_numbers<[1], [0], [0], [1], [0, 0, 1, 1], [], []>} : vector<16x128xbf16>, vector<128x128xbf16>, vector<16x128xf32> -> vector<16x128xf32>
    %19 = arith.addf %16, %18 : vector<16x128xf32>
    %20 = math.tanh %19 : vector<16x128xf32>
    %c1_i32 = arith.constant 1 : i32
    %21 = arith.index_cast %c1_i32 : i32 to index
    %c0_18 = arith.constant 0 : index
    %c0_19 = arith.constant 0 : index
    %22 = vector.load %arg10[%21, %c0_18, %c0_19] : memref<8x16x128xf32, #tpu.memory_space<vmem>>, vector<1x16x128xf32>
    %23 = vector.shape_cast %22 : vector<1x16x128xf32> to vector<16x128xf32>
    %24 = arith.truncf %20 : vector<16x128xf32> to vector<16x128xbf16>
    %cst_20 = arith.constant dense<0.000000e+00> : vector<16x128xf32>
    %25 = tpu.matmul %24, %12, %cst_20 {dimension_numbers = #tpu.dot_dimension_numbers<[1], [0], [0], [1], [0, 0, 1, 1], [], []>} : vector<16x128xbf16>, vector<128x128xbf16>, vector<16x128xf32> -> vector<16x128xf32>
    %26 = arith.addf %23, %25 : vector<16x128xf32>
    %27 = math.tanh %26 : vector<16x128xf32>
    %c2_i32 = arith.constant 2 : i32
    %28 = arith.index_cast %c2_i32 : i32 to index
    %c0_21 = arith.constant 0 : index
    %c0_22 = arith.constant 0 : index
    %29 = vector.load %arg10[%28, %c0_21, %c0_22] : memref<8x16x128xf32, #tpu.memory_space<vmem>>, vector<1x16x128xf32>
    %30 = vector.shape_cast %29 : vector<1x16x128xf32> to vector<16x128xf32>
    %31 = arith.truncf %27 : vector<16x128xf32> to vector<16x128xbf16>
    %cst_23 = arith.constant dense<0.000000e+00> : vector<16x128xf32>
    %32 = tpu.matmul %31, %12, %cst_23 {dimension_numbers = #tpu.dot_dimension_numbers<[1], [0], [0], [1], [0, 0, 1, 1], [], []>} : vector<16x128xbf16>, vector<128x128xbf16>, vector<16x128xf32> -> vector<16x128xf32>
    %33 = arith.addf %30, %32 : vector<16x128xf32>
    %34 = math.tanh %33 : vector<16x128xf32>
    %c3_i32 = arith.constant 3 : i32
    %35 = arith.index_cast %c3_i32 : i32 to index
    %c0_24 = arith.constant 0 : index
    %c0_25 = arith.constant 0 : index
    %36 = vector.load %arg10[%35, %c0_24, %c0_25] : memref<8x16x128xf32, #tpu.memory_space<vmem>>, vector<1x16x128xf32>
    %37 = vector.shape_cast %36 : vector<1x16x128xf32> to vector<16x128xf32>
    %38 = arith.truncf %34 : vector<16x128xf32> to vector<16x128xbf16>
    %cst_26 = arith.constant dense<0.000000e+00> : vector<16x128xf32>
    %39 = tpu.matmul %38, %12, %cst_26 {dimension_numbers = #tpu.dot_dimension_numbers<[1], [0], [0], [1], [0, 0, 1, 1], [], []>} : vector<16x128xbf16>, vector<128x128xbf16>, vector<16x128xf32> -> vector<16x128xf32>
    %40 = arith.addf %37, %39 : vector<16x128xf32>
    %41 = math.tanh %40 : vector<16x128xf32>
    %c4_i32 = arith.constant 4 : i32
    %42 = arith.index_cast %c4_i32 : i32 to index
    %c0_27 = arith.constant 0 : index
    %c0_28 = arith.constant 0 : index
    %43 = vector.load %arg10[%42, %c0_27, %c0_28] : memref<8x16x128xf32, #tpu.memory_space<vmem>>, vector<1x16x128xf32>
    %44 = vector.shape_cast %43 : vector<1x16x128xf32> to vector<16x128xf32>
    %45 = arith.truncf %41 : vector<16x128xf32> to vector<16x128xbf16>
    %cst_29 = arith.constant dense<0.000000e+00> : vector<16x128xf32>
    %46 = tpu.matmul %45, %12, %cst_29 {dimension_numbers = #tpu.dot_dimension_numbers<[1], [0], [0], [1], [0, 0, 1, 1], [], []>} : vector<16x128xbf16>, vector<128x128xbf16>, vector<16x128xf32> -> vector<16x128xf32>
    %47 = arith.addf %44, %46 : vector<16x128xf32>
    %48 = math.tanh %47 : vector<16x128xf32>
    %c5_i32 = arith.constant 5 : i32
    %49 = arith.index_cast %c5_i32 : i32 to index
    %c0_30 = arith.constant 0 : index
    %c0_31 = arith.constant 0 : index
    %50 = vector.load %arg10[%49, %c0_30, %c0_31] : memref<8x16x128xf32, #tpu.memory_space<vmem>>, vector<1x16x128xf32>
    %51 = vector.shape_cast %50 : vector<1x16x128xf32> to vector<16x128xf32>
    %52 = arith.truncf %48 : vector<16x128xf32> to vector<16x128xbf16>
    %cst_32 = arith.constant dense<0.000000e+00> : vector<16x128xf32>
    %53 = tpu.matmul %52, %12, %cst_32 {dimension_numbers = #tpu.dot_dimension_numbers<[1], [0], [0], [1], [0, 0, 1, 1], [], []>} : vector<16x128xbf16>, vector<128x128xbf16>, vector<16x128xf32> -> vector<16x128xf32>
    %54 = arith.addf %51, %53 : vector<16x128xf32>
    %55 = math.tanh %54 : vector<16x128xf32>
    %c6_i32 = arith.constant 6 : i32
    %56 = arith.index_cast %c6_i32 : i32 to index
    %c0_33 = arith.constant 0 : index
    %c0_34 = arith.constant 0 : index
    %57 = vector.load %arg10[%56, %c0_33, %c0_34] : memref<8x16x128xf32, #tpu.memory_space<vmem>>, vector<1x16x128xf32>
    %58 = vector.shape_cast %57 : vector<1x16x128xf32> to vector<16x128xf32>
    %59 = arith.truncf %55 : vector<16x128xf32> to vector<16x128xbf16>
    %cst_35 = arith.constant dense<0.000000e+00> : vector<16x128xf32>
    %60 = tpu.matmul %59, %12, %cst_35 {dimension_numbers = #tpu.dot_dimension_numbers<[1], [0], [0], [1], [0, 0, 1, 1], [], []>} : vector<16x128xbf16>, vector<128x128xbf16>, vector<16x128xf32> -> vector<16x128xf32>
    %61 = arith.addf %58, %60 : vector<16x128xf32>
    %62 = math.tanh %61 : vector<16x128xf32>
    %c7_i32 = arith.constant 7 : i32
    %63 = arith.index_cast %c7_i32 : i32 to index
    %c0_36 = arith.constant 0 : index
    %c0_37 = arith.constant 0 : index
    %64 = vector.load %arg10[%63, %c0_36, %c0_37] : memref<8x16x128xf32, #tpu.memory_space<vmem>>, vector<1x16x128xf32>
    %65 = vector.shape_cast %64 : vector<1x16x128xf32> to vector<16x128xf32>
    %66 = arith.truncf %62 : vector<16x128xf32> to vector<16x128xbf16>
    %cst_38 = arith.constant dense<0.000000e+00> : vector<16x128xf32>
    %67 = tpu.matmul %66, %12, %cst_38 {dimension_numbers = #tpu.dot_dimension_numbers<[1], [0], [0], [1], [0, 0, 1, 1], [], []>} : vector<16x128xbf16>, vector<128x128xbf16>, vector<16x128xf32> -> vector<16x128xf32>
    %68 = arith.addf %65, %67 : vector<16x128xf32>
    %69 = math.tanh %68 : vector<16x128xf32>
    %c8_i32 = arith.constant 8 : i32
    %c0_39 = arith.constant 0 : index
    %c0_40 = arith.constant 0 : index
    %70 = vector.load %arg9[%c0_39, %c0_40] : memref<16x128xf32, #tpu.memory_space<vmem>>, vector<16x128xf32>
    tpu.vector_store %arg9[%c0_39, %c0_40], %69 {strides = array<i32>} : memref<16x128xf32, #tpu.memory_space<vmem>>, vector<16x128xf32>,
    %c0_i32_41 = arith.constant 0 : i32
    %71 = arith.cmpi eq, %arg1, %c0_i32_41 : i32
    %72 = arith.extui %71 : i1 to i32
    %c0_i32_42 = arith.constant 0 : i32
    %73 = arith.cmpi ne, %72, %c0_i32_42 : i32
    scf.if %73 {
      %74 = arith.truncf %69 : vector<16x128xf32> to vector<16x128xbf16>
      %c0_43 = arith.constant 0 : index
      %c0_44 = arith.constant 0 : index
      %75 = vector.load %arg6[%c0_43, %c0_44] : memref<128x128xbf16, #tpu.memory_space<vmem>>, vector<128x128xbf16>
      %cst_45 = arith.constant dense<0.000000e+00> : vector<16x128xf32>
      %76 = tpu.matmul %74, %75, %cst_45 {dimension_numbers = #tpu.dot_dimension_numbers<[1], [0], [0], [1], [0, 0, 1, 1], [], []>} : vector<16x128xbf16>, vector<128x128xbf16>, vector<16x128xf32> -> vector<16x128xf32>
      %c0_46 = arith.constant 0 : index
      %c0_47 = arith.constant 0 : index
      %77 = vector.load %arg7[%c0_46, %c0_47] : memref<1x128xf32, #tpu.memory_space<vmem>>, vector<1x128xf32>
      %78 = vector.broadcast %77 : vector<1x128xf32> to vector<16x128xf32>
      %79 = arith.addf %76, %78 : vector<16x128xf32>
      %cst_48 = arith.constant dense<0xFF800000> : vector<16xf32>
      %80 = vector.multi_reduction <maximumf>, %79, %cst_48 [1] : vector<16x128xf32> to vector<16xf32>
      %81 = vector.shape_cast %80 : vector<16xf32> to vector<16x1xf32>
      %82 = vector.broadcast %81 : vector<16x1xf32> to vector<16x128xf32>
      %83 = arith.subf %79, %82 : vector<16x128xf32>
      %84 = math.exp %83 : vector<16x128xf32>
      %cst_49 = arith.constant dense<0.000000e+00> : vector<16xf32>
      %85 = vector.multi_reduction <add>, %84, %cst_49 [1] : vector<16x128xf32> to vector<16xf32>
      %86 = vector.shape_cast %85 : vector<16xf32> to vector<16x1xf32>
      %87 = tpu.reciprocal %86 {approx = true} : vector<16x1xf32> -> vector<16x1xf32>
      %88 = vector.broadcast %87 : vector<16x1xf32> to vector<16x128xf32>
      %89 = arith.mulf %84, %88 : vector<16x128xf32>
      %c0_50 = arith.constant 0 : index
      %c0_51 = arith.constant 0 : index
      %90 = vector.load %arg8[%c0_50, %c0_51] : memref<16x128xf32, #tpu.memory_space<vmem>>, vector<16x128xf32>
      tpu.vector_store %arg8[%c0_50, %c0_51], %89 {strides = array<i32>} : memref<16x128xf32, #tpu.memory_space<vmem>>, vector<16x128xf32>,
    } else {
    }
    return
  }
  func.func @transform_0(%arg0: i32, %arg1: i32) -> (i32, i32, i32) {
    %c0_i32 = arith.constant 0 : i32
    %c0_i32_0 = arith.constant 0 : i32
    return %arg1, %arg0, %c0_i32 : i32, i32, i32
  }
  func.func @transform_1(%arg0: i32, %arg1: i32) -> (i32, i32) {
    %c0_i32 = arith.constant 0 : i32
    %c0_i32_0 = arith.constant 0 : i32
    %c0_i32_1 = arith.constant 0 : i32
    return %c0_i32, %c0_i32_0 : i32, i32
  }
  func.func @transform_2(%arg0: i32, %arg1: i32) -> (i32, i32) {
    %c0_i32 = arith.constant 0 : i32
    %c0_i32_0 = arith.constant 0 : i32
    %c0_i32_1 = arith.constant 0 : i32
    return %c0_i32, %c0_i32_0 : i32, i32
  }
  func.func @transform_3(%arg0: i32, %arg1: i32) -> (i32, i32) {
    %c0_i32 = arith.constant 0 : i32
    %c0_i32_0 = arith.constant 0 : i32
    %c0_i32_1 = arith.constant 0 : i32
    return %c0_i32, %c0_i32_0 : i32, i32
  }
  func.func @transform_4(%arg0: i32, %arg1: i32) -> (i32, i32) {
    %c0_i32 = arith.constant 0 : i32
    %c0_i32_0 = arith.constant 0 : i32
    %c0_i32_1 = arith.constant 0 : i32
    return %c0_i32, %c0_i32_0 : i32, i32
  }
  func.func @transform_5(%arg0: i32, %arg1: i32) -> (i32, i32) {
    %c0_i32 = arith.constant 0 : i32
    %c0_i32_0 = arith.constant 0 : i32
    %c0_i32_1 = arith.constant 0 : i32
    return %c0_i32, %c0_i32_0 : i32, i32
  }
  func.func @transform_6(%arg0: i32, %arg1: i32) -> (i32, i32) {
    %c0_i32 = arith.constant 0 : i32
    %c0_i32_0 = arith.constant 0 : i32
    return %arg0, %c0_i32 : i32, i32
  }
}

</mosaic_0001>

<llo_original>
// kernel: tpu_custom_call.1
$region0: #{tpu_custom_call.1}
  #allocation0 [shape = 'u32[]', space=smem, size = 0x4, offset = 0x4, fixed_abs, tag = 'smem constant byte address 0x4 - core index']
  #allocation1 [shape = 'u32[144,128]{1,0:T(1,128)}', space=vmem, size = 0x12000, scoped, tag = 'internal scratch']
  #allocation2 [shape = 'f32[16,128]{1,0:T(8,128)}', space=vmem, size = 0x2000, scoped, tag = 'scratch operand']
  #allocation3 [shape = 'f32[8,16,128]{2,1,0:T(8,128)}', space=vmem, size = 0x10000, scoped, tag = 'scratch operand']
  %s0 = inlined_call_operand.hbm [shape: bf16[8,16,128], index: 0, kind: input, shape index: {}]
  %s1 = inlined_call_operand.hbm [shape: bf16[128,128], index: 1, kind: input, shape index: {}]
  %s2 = inlined_call_operand.hbm [shape: bf16[128,128], index: 2, kind: input, shape index: {}]
  %s3 = inlined_call_operand.vmem [shape: f32[1,128], index: 3, kind: input, shape index: {}]
  %s4 = inlined_call_operand.hbm [shape: bf16[128,128], index: 4, kind: input, shape index: {}]
  %s5 = inlined_call_operand.vmem [shape: f32[1,128], index: 5, kind: input, shape index: {}]
  %s6 = inlined_call_operand.hbm [shape: f32[16,128], index: 6, kind: output, shape index: {}]
  %s7 = sld [smem:[#allocation0]]
  $region58: #{tpu_custom_call.1} parent=0
    _
  %s9 = ssub.s32 1, %s7
  %s10 = scalar_select 0, %s9, %s7
  $region1: #{tpu_custom_call.1} parent=0
    #allocation4 [shape = 'u8[32768]{0}', space=vmem, size = 0x8000, scoped, tag = 'input window, operand 0, single buffered']
    #allocation5 [shape = 's32[1]{0}', space=sflag, size = 0x4, scoped, tag = 'scoped memory for tpu_custom_call.1']
    #allocation6 [shape = 's32[1]{0}', space=sflag, size = 0x4, scoped, tag = 'scoped memory for tpu_custom_call.1']
    #allocation7 [shape = 'u8[32768]{0}', space=vmem, size = 0x8000, scoped, tag = 'input window, operand 1, single buffered']
    #allocation8 [shape = 's32[1]{0}', space=sflag, size = 0x4, scoped, tag = 'scoped memory for tpu_custom_call.1']
    #allocation9 [shape = 'u8[32768]{0}', space=vmem, size = 0x8000, scoped, tag = 'input window, operand 2, single buffered']
    #allocation10 [shape = 'u8[32768]{0}', space=vmem, size = 0x8000, scoped, tag = 'input window, operand 4, single buffered']
    #allocation11 [shape = 's32[1]{0}', space=sflag, size = 0x4, scoped, tag = 'scoped memory for tpu_custom_call.1']
    #allocation12 [shape = 'u8[8192]{0}', space=vmem, size = 0x2000, scoped, tag = 'output window, operand 0, single buffered']
    %11 = vsyncpa [#allocation5], 0
    %12 = vsyncpa [#allocation8], 0
    %13 = vsyncpa [#allocation11], 0
    %14 = vsyncpa [#allocation6], 0
    // Predicated region
    $region2: #{tpu_custom_call.1} parent=1 // pred_check
      _
    $region3: #{tpu_custom_call.1} parent=1 // pred_check_branch
      %16 = sbr.rel (0) target = $region5
    $region4: #{tpu_custom_call.1} parent=1 // pred_region
      %s18 = ssub.s32 1024, 1024
      %19 = vsyncadd [#allocation5], %s18
      %s20 = sshll.u32 [#allocation4], 4
      %s21 = int_to_ptr.vmem [resolvable:$true] %s20
      %26 = dma.hbm_to_vmem [thread:$0]  %s0, 1024, %s21, [#allocation5], 64, 64, 4
    $region5: #{tpu_custom_call.1} parent=1 // pred_fallthru
      _
    // Predicated region
    $region6: #{tpu_custom_call.1} parent=1 // pred_check
      _
    $region7: #{tpu_custom_call.1} parent=1 // pred_check_branch
      %28 = sbr.rel (0) target = $region9
    $region8: #{tpu_custom_call.1} parent=1 // pred_region
      %s30 = ssub.s32 1024, 1024
      %31 = vsyncadd [#allocation8], %s30
      %s32 = sshll.u32 [#allocation7], 4
      %s33 = int_to_ptr.vmem [resolvable:$true] %s32
      %38 = dma.hbm_to_vmem [thread:$0]  %s1, 1024, %s33, [#allocation8], 64, 64, 4
    $region9: #{tpu_custom_call.1} parent=1 // pred_fallthru
      _
    // Predicated region
    $region10: #{tpu_custom_call.1} parent=1 // pred_check
      _
    $region11: #{tpu_custom_call.1} parent=1 // pred_check_branch
      %40 = sbr.rel (0) target = $region13
    $region12: #{tpu_custom_call.1} parent=1 // pred_region
      %s42 = ssub.s32 1024, 1024
      %43 = vsyncadd [#allocation8], %s42
      %s44 = sshll.u32 [#allocation9], 4
      %s45 = int_to_ptr.vmem [resolvable:$true] %s44
      %50 = dma.hbm_to_vmem [thread:$0]  %s2, 1024, %s45, [#allocation8], 64, 64, 4
    $region13: #{tpu_custom_call.1} parent=1 // pred_fallthru
      _
    // Predicated region
    $region14: #{tpu_custom_call.1} parent=1 // pred_check
      _
    $region15: #{tpu_custom_call.1} parent=1 // pred_check_branch
      %52 = sbr.rel (0) target = $region17
    $region16: #{tpu_custom_call.1} parent=1 // pred_region
      _
    $region17: #{tpu_custom_call.1} parent=1 // pred_fallthru
      _
    // Predicated region
    $region18: #{tpu_custom_call.1} parent=1 // pred_check
      _
    $region19: #{tpu_custom_call.1} parent=1 // pred_check_branch
      %54 = sbr.rel (0) target = $region21
    $region20: #{tpu_custom_call.1} parent=1 // pred_region
      %s56 = ssub.s32 1024, 1024
      %57 = vsyncadd [#allocation11], %s56
      %s58 = sshll.u32 [#allocation10], 4
      %s59 = int_to_ptr.vmem [resolvable:$true] %s58
      %64 = dma.hbm_to_vmem [thread:$0]  %s4, 1024, %s59, [#allocation11], 64, 64, 4
    $region21: #{tpu_custom_call.1} parent=1 // pred_fallthru
      _
    // Predicated region
    $region22: #{tpu_custom_call.1} parent=1 // pred_check
      _
    $region23: #{tpu_custom_call.1} parent=1 // pred_check_branch
      %66 = sbr.rel (0) target = $region25
    $region24: #{tpu_custom_call.1} parent=1 // pred_region
      _
    $region25: #{tpu_custom_call.1} parent=1 // pred_fallthru
      _
    // Predicated region
    $region26: #{tpu_custom_call.1} parent=1 // pred_check
      _
    $region27: #{tpu_custom_call.1} parent=1 // pred_check_branch
      %68 = sbr.rel (0) target = $region29
    $region28: #{tpu_custom_call.1} parent=1 // pred_region
      %69 = dma.done [#allocation5], 1024
    $region29: #{tpu_custom_call.1} parent=1 // pred_fallthru
      _
    // Predicated region
    $region30: #{tpu_custom_call.1} parent=1 // pred_check
      _
    $region31: #{tpu_custom_call.1} parent=1 // pred_check_branch
      %71 = sbr.rel (0) target = $region33
    $region32: #{tpu_custom_call.1} parent=1 // pred_region
      %72 = dma.done [#allocation8], 1024
    $region33: #{tpu_custom_call.1} parent=1 // pred_fallthru
      _
    // Predicated region
    $region34: #{tpu_custom_call.1} parent=1 // pred_check
      _
    $region35: #{tpu_custom_call.1} parent=1 // pred_check_branch
      %74 = sbr.rel (0) target = $region37
    $region36: #{tpu_custom_call.1} parent=1 // pred_region
      %75 = dma.done [#allocation8], 1024
    $region37: #{tpu_custom_call.1} parent=1 // pred_fallthru
      _
    // Predicated region
    $region38: #{tpu_custom_call.1} parent=1 // pred_check
      _
    $region39: #{tpu_custom_call.1} parent=1 // pred_check_branch
      %77 = sbr.rel (0) target = $region41
    $region40: #{tpu_custom_call.1} parent=1 // pred_region
      %78 = dma.done [#allocation11], 1024
    $region41: #{tpu_custom_call.1} parent=1 // pred_fallthru
      _
    %p80 = scmp.eq.s32.totalorder 0, 0
    // Predicated region
    $region42: #{tpu_custom_call.1} parent=1 // pred_check
      %p81 = pneg %p80
    $region43: #{tpu_custom_call.1} parent=1 // pred_check_branch
      %83 = sbr.rel (%p81) target = $region45
    $region44: #{tpu_custom_call.1} parent=1 // pred_region
      %84 = vst [vmem:[#allocation2] sm:$0xff] 0.0
      %85 = vst [vmem:[#allocation2 + $0x8] sm:$0xff] 0.0
    $region45: #{tpu_custom_call.1} parent=1 // pred_fallthru
      _
    %v86 = vld [vmem:[#allocation4] sm:$0xf]
    %v87 = vld [vmem:[#allocation4 + $0x4] sm:$0xf]
    %v88 = vld [vmem:[#allocation4 + $0x8] sm:$0xf]
    %v89 = vld [vmem:[#allocation4 + $0xc] sm:$0xf]
    %v90 = vld [vmem:[#allocation4 + $0x10] sm:$0xf]
    %v91 = vld [vmem:[#allocation4 + $0x14] sm:$0xf]
    %v92 = vld [vmem:[#allocation4 + $0x18] sm:$0xf]
    %v93 = vld [vmem:[#allocation4 + $0x1c] sm:$0xf]
    %v94 = vld [vmem:[#allocation4 + $0x20] sm:$0xf]
    %v95 = vld [vmem:[#allocation4 + $0x24] sm:$0xf]
    %v96 = vld [vmem:[#allocation4 + $0x28] sm:$0xf]
    %v97 = vld [vmem:[#allocation4 + $0x2c] sm:$0xf]
    %v98 = vld [vmem:[#allocation4 + $0x30] sm:$0xf]
    %v99 = vld [vmem:[#allocation4 + $0x34] sm:$0xf]
    %v100 = vld [vmem:[#allocation4 + $0x38] sm:$0xf]
    %v101 = vld [vmem:[#allocation4 + $0x3c] sm:$0xf]
    %v102 = vld [vmem:[#allocation7] sm:$0xf]
    %v103 = vld [vmem:[#allocation7 + $0x4] sm:$0xf]
    %v104 = vld [vmem:[#allocation7 + $0x8] sm:$0xf]
    %v105 = vld [vmem:[#allocation7 + $0xc] sm:$0xf]
    %v106 = vld [vmem:[#allocation7 + $0x10] sm:$0xf]
    %v107 = vld [vmem:[#allocation7 + $0x14] sm:$0xf]
    %v108 = vld [vmem:[#allocation7 + $0x18] sm:$0xf]
    %v109 = vld [vmem:[#allocation7 + $0x1c] sm:$0xf]
    %v110 = vld [vmem:[#allocation7 + $0x20] sm:$0xf]
    %v111 = vld [vmem:[#allocation7 + $0x24] sm:$0xf]
    %v112 = vld [vmem:[#allocation7 + $0x28] sm:$0xf]
    %v113 = vld [vmem:[#allocation7 + $0x2c] sm:$0xf]
    %v114 = vld [vmem:[#allocation7 + $0x30] sm:$0xf]
    %v115 = vld [vmem:[#allocation7 + $0x34] sm:$0xf]
    %v116 = vld [vmem:[#allocation7 + $0x38] sm:$0xf]
    %v117 = vld [vmem:[#allocation7 + $0x3c] sm:$0xf]
    %v118 = vld [vmem:[%s3] sm:$0x1]
    %v120 = vlaneseq
    %v121 = vshrl.u32 %v120, 7
    %v122 = vsub.s32 0, %v121
    %v123 = vrot.slane %v118, %v122
    %v141 = vunpack.c.l.b16 %v86
    %v142 = vunpack.c.l.b16 %v87
    %v143 = vunpack.c.l.b16 %v88
    %v144 = vunpack.c.l.b16 %v89
    %v145 = vunpack.c.l.b16 %v90
    %v146 = vunpack.c.l.b16 %v91
    %v147 = vunpack.c.l.b16 %v92
    %v148 = vunpack.c.l.b16 %v93
    %v149 = vunpack.c.l.b16 %v94
    %v150 = vunpack.c.l.b16 %v95
    %v151 = vunpack.c.l.b16 %v96
    %v152 = vunpack.c.l.b16 %v97
    %v153 = vunpack.c.l.b16 %v98
    %v154 = vunpack.c.l.b16 %v99
    %v155 = vunpack.c.l.b16 %v100
    %v156 = vunpack.c.l.b16 %v101
    %v157 = vpack.c.b16 %v142, %v141
    %v158 = vpack.c.b16 %v144, %v143
    %v159 = vpack.c.b16 %v146, %v145
    %v160 = vpack.c.b16 %v148, %v147
    %v161 = vpack.c.b16 %v150, %v149
    %v162 = vpack.c.b16 %v152, %v151
    %v163 = vpack.c.b16 %v154, %v153
    %v164 = vpack.c.b16 %v156, %v155
    %v189 = vunpack.c.l.b16 %v102
    %v190 = vunpack.c.l.b16 %v103
    %v191 = vunpack.c.l.b16 %v104
    %v192 = vunpack.c.l.b16 %v105
    %v193 = vunpack.c.l.b16 %v106
    %v194 = vunpack.c.l.b16 %v107
    %v195 = vunpack.c.l.b16 %v108
    %v196 = vunpack.c.l.b16 %v109
    %v197 = vunpack.c.l.b16 %v110
    %v198 = vunpack.c.l.b16 %v111
    %v199 = vunpack.c.l.b16 %v112
    %v200 = vunpack.c.l.b16 %v113
    %v201 = vunpack.c.l.b16 %v114
    %v202 = vunpack.c.l.b16 %v115
    %v203 = vunpack.c.l.b16 %v116
    %v204 = vunpack.c.l.b16 %v117
    %v205 = vpack.c.b16 %v190, %v189
    %v206 = vpack.c.b16 %v192, %v191
    %v207 = vpack.c.b16 %v194, %v193
    %v208 = vpack.c.b16 %v196, %v195
    %v209 = vpack.c.b16 %v198, %v197
    %v210 = vpack.c.b16 %v200, %v199
    %v211 = vpack.c.b16 %v202, %v201
    %v212 = vpack.c.b16 %v204, %v203
    %221 = vmatprep.subr.bf16.mxu0 0
    %222 = vmatpush1.bf16.msra.mxu0 %v212
    %223 = vmatprep.subr.bf16.mxu0 0
    %224 = vmatpush1.bf16.msra.mxu0 %v211
    %225 = vmatprep.subr.bf16.mxu0 0
    %226 = vmatpush1.bf16.msra.mxu0 %v210
    %227 = vmatprep.subr.bf16.mxu0 0
    %228 = vmatpush1.bf16.msra.mxu0 %v209
    %229 = vmatprep.subr.bf16.mxu0 0
    %230 = vmatpush1.bf16.msra.mxu0 %v208
    %231 = vmatprep.subr.bf16.mxu0 0
    %232 = vmatpush1.bf16.msra.mxu0 %v207
    %233 = vmatprep.subr.bf16.mxu0 0
    %234 = vmatpush1.bf16.msra.mxu0 %v206
    %235 = vmatprep.subr.bf16.mxu0 0
    %236 = vmatpush1.bf16.msra.mxu0 %v205
    %237 = vmatprep.subr.bf16.mxu0 0
    %238 = vmatpush2.bf16.msra.mxu0 0
    %239 = vmatprep.subr.bf16.mxu0 0
    %240 = vmatpush2.bf16.msra.mxu0 0
    %241 = vmatprep.subr.bf16.mxu0 0
    %242 = vmatpush2.bf16.msra.mxu0 0
    %243 = vmatprep.subr.bf16.mxu0 0
    %244 = vmatpush2.bf16.msra.mxu0 0
    %245 = vmatprep.subr.bf16.mxu0 0
    %246 = vmatpush2.bf16.msra.mxu0 0
    %247 = vmatprep.subr.bf16.mxu0 0
    %248 = vmatpush2.bf16.msra.mxu0 0
    %249 = vmatprep.subr.bf16.mxu0 0
    %250 = vmatpush2.bf16.msra.mxu0 0
    %251 = vmatprep.subr.bf16.mxu0 0
    %252 = vmatpush2.bf16.msra.mxu0 0
    %253 = vmatprep.mubr.bf16.mxu0 0
    %254 = vmatmul.mubr.bf16.gmra.mxu0 %v157
    %v255 = vpop.f32.mrf.mxu0
    %v256 = vadd.f32 %v123, %v255
    %v257 = vpop.f32.mrf.mxu0
    %v258 = vpop.f32.mrf.mxu0
    %v259 = vadd.f32 %v123, %v258
    %v260 = vpop.f32.mrf.mxu0
    %261 = vmatprep.mubr.bf16.mxu0 0
    %262 = vmatmul.mubr.bf16.gmra.mxu0 %v158
    %v263 = vpop.f32.mrf.mxu0
    %v264 = vadd.f32 %v123, %v263
    %v265 = vpop.f32.mrf.mxu0
    %v266 = vpop.f32.mrf.mxu0
    %v267 = vadd.f32 %v123, %v266
    %v268 = vpop.f32.mrf.mxu0
    %269 = vmatprep.mubr.bf16.mxu0 0
    %270 = vmatmul.mubr.bf16.gmra.mxu0 %v159
    %v271 = vpop.f32.mrf.mxu0
    %v272 = vadd.f32 %v123, %v271
    %v273 = vpop.f32.mrf.mxu0
    %v274 = vpop.f32.mrf.mxu0
    %v275 = vadd.f32 %v123, %v274
    %v276 = vpop.f32.mrf.mxu0
    %277 = vmatprep.mubr.bf16.mxu0 0
    %278 = vmatmul.mubr.bf16.gmra.mxu0 %v160
    %v279 = vpop.f32.mrf.mxu0
    %v280 = vadd.f32 %v123, %v279
    %v281 = vpop.f32.mrf.mxu0
    %v282 = vpop.f32.mrf.mxu0
    %v283 = vadd.f32 %v123, %v282
    %v284 = vpop.f32.mrf.mxu0
    %285 = vmatprep.mubr.bf16.mxu0 0
    %286 = vmatmul.mubr.bf16.gmra.mxu0 %v161
    %v287 = vpop.f32.mrf.mxu0
    %v288 = vadd.f32 %v123, %v287
    %v289 = vpop.f32.mrf.mxu0
    %v290 = vpop.f32.mrf.mxu0
    %v291 = vadd.f32 %v123, %v290
    %v292 = vpop.f32.mrf.mxu0
    %293 = vmatprep.mubr.bf16.mxu0 0
    %294 = vmatmul.mubr.bf16.gmra.mxu0 %v162
    %v295 = vpop.f32.mrf.mxu0
    %v296 = vadd.f32 %v123, %v295
    %v297 = vpop.f32.mrf.mxu0
    %v298 = vpop.f32.mrf.mxu0
    %v299 = vadd.f32 %v123, %v298
    %v300 = vpop.f32.mrf.mxu0
    %301 = vmatprep.mubr.bf16.mxu0 0
    %302 = vmatmul.mubr.bf16.gmra.mxu0 %v163
    %v303 = vpop.f32.mrf.mxu0
    %v304 = vadd.f32 %v123, %v303
    %v305 = vpop.f32.mrf.mxu0
    %v306 = vpop.f32.mrf.mxu0
    %v307 = vadd.f32 %v123, %v306
    %v308 = vpop.f32.mrf.mxu0
    %309 = vmatprep.mubr.bf16.mxu0 0
    %310 = vmatmul.mubr.bf16.gmra.mxu0 %v164
    %v311 = vpop.f32.mrf.mxu0
    %v312 = vadd.f32 %v123, %v311
    %v313 = vpop.f32.mrf.mxu0
    %v314 = vpop.f32.mrf.mxu0
    %v315 = vadd.f32 %v123, %v314
    %v316 = vpop.f32.mrf.mxu0
    %317 = vdwg.mxu0
    %318 = vst [vmem:[#allocation3] sm:$0xff] %v256
    %319 = vst [vmem:[#allocation3 + $0x8] sm:$0xff] %v259
    %320 = vst [vmem:[#allocation3 + $0x10] sm:$0xff] %v264
    %321 = vst [vmem:[#allocation3 + $0x18] sm:$0xff] %v267
    %322 = vst [vmem:[#allocation3 + $0x20] sm:$0xff] %v272
    %323 = vst [vmem:[#allocation3 + $0x28] sm:$0xff] %v275
    %324 = vst [vmem:[#allocation3 + $0x30] sm:$0xff] %v280
    %325 = vst [vmem:[#allocation3 + $0x38] sm:$0xff] %v283
    %326 = vst [vmem:[#allocation3 + $0x40] sm:$0xff] %v288
    %327 = vst [vmem:[#allocation3 + $0x48] sm:$0xff] %v291
    %328 = vst [vmem:[#allocation3 + $0x50] sm:$0xff] %v296
    %329 = vst [vmem:[#allocation3 + $0x58] sm:$0xff] %v299
    %330 = vst [vmem:[#allocation3 + $0x60] sm:$0xff] %v304
    %331 = vst [vmem:[#allocation3 + $0x68] sm:$0xff] %v307
    %332 = vst [vmem:[#allocation3 + $0x70] sm:$0xff] %v312
    %333 = vst [vmem:[#allocation3 + $0x78] sm:$0xff] %v315
    %v334 = vld [vmem:[#allocation9] sm:$0xf]
    %v335 = vld [vmem:[#allocation9 + $0x4] sm:$0xf]
    %v336 = vld [vmem:[#allocation9 + $0x8] sm:$0xf]
    %v337 = vld [vmem:[#allocation9 + $0xc] sm:$0xf]
    %v338 = vld [vmem:[#allocation9 + $0x10] sm:$0xf]
    %v339 = vld [vmem:[#allocation9 + $0x14] sm:$0xf]
    %v340 = vld [vmem:[#allocation9 + $0x18] sm:$0xf]
    %v341 = vld [vmem:[#allocation9 + $0x1c] sm:$0xf]
    %v342 = vld [vmem:[#allocation9 + $0x20] sm:$0xf]
    %v343 = vld [vmem:[#allocation9 + $0x24] sm:$0xf]
    %v344 = vld [vmem:[#allocation9 + $0x28] sm:$0xf]
    %v345 = vld [vmem:[#allocation9 + $0x2c] sm:$0xf]
    %v346 = vld [vmem:[#allocation9 + $0x30] sm:$0xf]
    %v347 = vld [vmem:[#allocation9 + $0x34] sm:$0xf]
    %v348 = vld [vmem:[#allocation9 + $0x38] sm:$0xf]
    %v349 = vld [vmem:[#allocation9 + $0x3c] sm:$0xf]
    %v350 = vld [vmem:[#allocation2] sm:$0xff]
    %v351 = vld [vmem:[#allocation2 + $0x8] sm:$0xff]
    %v352 = vld [vmem:[#allocation3] sm:$0xff]
    %v353 = vld [vmem:[#allocation3 + $0x8] sm:$0xff]
    %v354 = vpack.c.bf16 %v351, %v350
    %v371 = vunpack.c.l.b16 %v334
    %v372 = vunpack.c.l.b16 %v335
    %v373 = vunpack.c.l.b16 %v336
    %v374 = vunpack.c.l.b16 %v337
    %v375 = vunpack.c.l.b16 %v338
    %v376 = vunpack.c.l.b16 %v339
    %v377 = vunpack.c.l.b16 %v340
    %v378 = vunpack.c.l.b16 %v341
    %v379 = vunpack.c.l.b16 %v342
    %v380 = vunpack.c.l.b16 %v343
    %v381 = vunpack.c.l.b16 %v344
    %v382 = vunpack.c.l.b16 %v345
    %v383 = vunpack.c.l.b16 %v346
    %v384 = vunpack.c.l.b16 %v347
    %v385 = vunpack.c.l.b16 %v348
    %v386 = vunpack.c.l.b16 %v349
    %v387 = vpack.c.b16 %v372, %v371
    %v388 = vpack.c.b16 %v374, %v373
    %v389 = vpack.c.b16 %v376, %v375
    %v390 = vpack.c.b16 %v378, %v377
    %v391 = vpack.c.b16 %v380, %v379
    %v392 = vpack.c.b16 %v382, %v381
    %v393 = vpack.c.b16 %v384, %v383
    %v394 = vpack.c.b16 %v386, %v385
    %403 = vmatprep.subr.bf16.mxu0 0
    %404 = vmatpush1.bf16.msra.mxu0 %v394
    %405 = vmatprep.subr.bf16.mxu0 0
    %406 = vmatpush1.bf16.msra.mxu0 %v393
    %407 = vmatprep.subr.bf16.mxu0 0
    %408 = vmatpush1.bf16.msra.mxu0 %v392
    %409 = vmatprep.subr.bf16.mxu0 0
    %410 = vmatpush1.bf16.msra.mxu0 %v391
    %411 = vmatprep.subr.bf16.mxu0 0
    %412 = vmatpush1.bf16.msra.mxu0 %v390
    %413 = vmatprep.subr.bf16.mxu0 0
    %414 = vmatpush1.bf16.msra.mxu0 %v389
    %415 = vmatprep.subr.bf16.mxu0 0
    %416 = vmatpush1.bf16.msra.mxu0 %v388
    %417 = vmatprep.subr.bf16.mxu0 0
    %418 = vmatpush1.bf16.msra.mxu0 %v387
    %419 = vmatprep.subr.bf16.mxu0 0
    %420 = vmatpush2.bf16.msra.mxu0 0
    %421 = vmatprep.subr.bf16.mxu0 0
    %422 = vmatpush2.bf16.msra.mxu0 0
    %423 = vmatprep.subr.bf16.mxu0 0
    %424 = vmatpush2.bf16.msra.mxu0 0
    %425 = vmatprep.subr.bf16.mxu0 0
    %426 = vmatpush2.bf16.msra.mxu0 0
    %427 = vmatprep.subr.bf16.mxu0 0
    %428 = vmatpush2.bf16.msra.mxu0 0
    %429 = vmatprep.subr.bf16.mxu0 0
    %430 = vmatpush2.bf16.msra.mxu0 0
    %431 = vmatprep.subr.bf16.mxu0 0
    %432 = vmatpush2.bf16.msra.mxu0 0
    %433 = vmatprep.subr.bf16.mxu0 0
    %434 = vmatpush2.bf16.msra.mxu0 0
    %435 = vmatprep.mubr.bf16.mxu0 0
    %436 = vmatmul.mubr.bf16.gmra.mxu0 %v354
    %v437 = vpop.f32.mrf.mxu0
    %v438 = vadd.f32 0.0, %v437
    %v439 = vpop.f32.mrf.mxu0
    %v440 = vpop.f32.mrf.mxu0
    %v441 = vadd.f32 0.0, %v440
    %v442 = vpop.f32.mrf.mxu0
    %443 = vdwg.mxu0
    %v444 = vadd.f32 %v352, %v438
    %v445 = vadd.f32 %v353, %v441
    %v446 = vtanh.pop %v444
    %v447 = vtanh.pop %v445
    %s448 = scalar_lea.vmem [#allocation3], 16
    %v449 = vld [vmem:[%s448] sm:$0xff]
    %v450 = vld [vmem:[%s448 + $0x8] sm:$0xff]
    %v451 = vpack.c.bf16 %v447, %v446
    %452 = vmatprep.subr.bf16.mxu0 0
    %453 = vmatpush1.bf16.msra.mxu0 %v394
    %454 = vmatprep.subr.bf16.mxu0 0
    %455 = vmatpush1.bf16.msra.mxu0 %v393
    %456 = vmatprep.subr.bf16.mxu0 0
    %457 = vmatpush1.bf16.msra.mxu0 %v392
    %458 = vmatprep.subr.bf16.mxu0 0
    %459 = vmatpush1.bf16.msra.mxu0 %v391
    %460 = vmatprep.subr.bf16.mxu0 0
    %461 = vmatpush1.bf16.msra.mxu0 %v390
    %462 = vmatprep.subr.bf16.mxu0 0
    %463 = vmatpush1.bf16.msra.mxu0 %v389
    %464 = vmatprep.subr.bf16.mxu0 0
    %465 = vmatpush1.bf16.msra.mxu0 %v388
    %466 = vmatprep.subr.bf16.mxu0 0
    %467 = vmatpush1.bf16.msra.mxu0 %v387
    %468 = vmatprep.subr.bf16.mxu0 0
    %469 = vmatpush2.bf16.msra.mxu0 0
    %470 = vmatprep.subr.bf16.mxu0 0
    %471 = vmatpush2.bf16.msra.mxu0 0
    %472 = vmatprep.subr.bf16.mxu0 0
    %473 = vmatpush2.bf16.msra.mxu0 0
    %474 = vmatprep.subr.bf16.mxu0 0
    %475 = vmatpush2.bf16.msra.mxu0 0
    %476 = vmatprep.subr.bf16.mxu0 0
    %477 = vmatpush2.bf16.msra.mxu0 0
    %478 = vmatprep.subr.bf16.mxu0 0
    %479 = vmatpush2.bf16.msra.mxu0 0
    %480 = vmatprep.subr.bf16.mxu0 0
    %481 = vmatpush2.bf16.msra.mxu0 0
    %482 = vmatprep.subr.bf16.mxu0 0
    %483 = vmatpush2.bf16.msra.mxu0 0
    %484 = vmatprep.mubr.bf16.mxu0 0
    %485 = vmatmul.mubr.bf16.gmra.mxu0 %v451
    %v486 = vpop.f32.mrf.mxu0
    %v487 = vadd.f32 0.0, %v486
    %v488 = vpop.f32.mrf.mxu0
    %v489 = vpop.f32.mrf.mxu0
    %v490 = vadd.f32 0.0, %v489
    %v491 = vpop.f32.mrf.mxu0
    %492 = vdwg.mxu0
    %v493 = vadd.f32 %v449, %v487
    %v494 = vadd.f32 %v450, %v490
    %v495 = vtanh.pop %v493
    %v496 = vtanh.pop %v494
    %s497 = scalar_lea.vmem [#allocation3], 32
    %v498 = vld [vmem:[%s497] sm:$0xff]
    %v499 = vld [vmem:[%s497 + $0x8] sm:$0xff]
    %v500 = vpack.c.bf16 %v496, %v495
    %501 = vmatprep.subr.bf16.mxu0 0
    %502 = vmatpush1.bf16.msra.mxu0 %v394
    %503 = vmatprep.subr.bf16.mxu0 0
    %504 = vmatpush1.bf16.msra.mxu0 %v393
    %505 = vmatprep.subr.bf16.mxu0 0
    %506 = vmatpush1.bf16.msra.mxu0 %v392
    %507 = vmatprep.subr.bf16.mxu0 0
    %508 = vmatpush1.bf16.msra.mxu0 %v391
    %509 = vmatprep.subr.bf16.mxu0 0
    %510 = vmatpush1.bf16.msra.mxu0 %v390
    %511 = vmatprep.subr.bf16.mxu0 0
    %512 = vmatpush1.bf16.msra.mxu0 %v389
    %513 = vmatprep.subr.bf16.mxu0 0
    %514 = vmatpush1.bf16.msra.mxu0 %v388
    %515 = vmatprep.subr.bf16.mxu0 0
    %516 = vmatpush1.bf16.msra.mxu0 %v387
    %517 = vmatprep.subr.bf16.mxu0 0
    %518 = vmatpush2.bf16.msra.mxu0 0
    %519 = vmatprep.subr.bf16.mxu0 0
    %520 = vmatpush2.bf16.msra.mxu0 0
    %521 = vmatprep.subr.bf16.mxu0 0
    %522 = vmatpush2.bf16.msra.mxu0 0
    %523 = vmatprep.subr.bf16.mxu0 0
    %524 = vmatpush2.bf16.msra.mxu0 0
    %525 = vmatprep.subr.bf16.mxu0 0
    %526 = vmatpush2.bf16.msra.mxu0 0
    %527 = vmatprep.subr.bf16.mxu0 0
    %528 = vmatpush2.bf16.msra.mxu0 0
    %529 = vmatprep.subr.bf16.mxu0 0
    %530 = vmatpush2.bf16.msra.mxu0 0
    %531 = vmatprep.subr.bf16.mxu0 0
    %532 = vmatpush2.bf16.msra.mxu0 0
    %533 = vmatprep.mubr.bf16.mxu0 0
    %534 = vmatmul.mubr.bf16.gmra.mxu0 %v500
    %v535 = vpop.f32.mrf.mxu0
    %v536 = vadd.f32 0.0, %v535
    %v537 = vpop.f32.mrf.mxu0
    %v538 = vpop.f32.mrf.mxu0
    %v539 = vadd.f32 0.0, %v538
    %v540 = vpop.f32.mrf.mxu0
    %541 = vdwg.mxu0
    %v542 = vadd.f32 %v498, %v536
    %v543 = vadd.f32 %v499, %v539
    %v544 = vtanh.pop %v542
    %v545 = vtanh.pop %v543
    %s546 = scalar_lea.vmem [#allocation3], 48
    %v547 = vld [vmem:[%s546] sm:$0xff]
    %v548 = vld [vmem:[%s546 + $0x8] sm:$0xff]
    %v549 = vpack.c.bf16 %v545, %v544
    %550 = vmatprep.subr.bf16.mxu0 0
    %551 = vmatpush1.bf16.msra.mxu0 %v394
    %552 = vmatprep.subr.bf16.mxu0 0
    %553 = vmatpush1.bf16.msra.mxu0 %v393
    %554 = vmatprep.subr.bf16.mxu0 0
    %555 = vmatpush1.bf16.msra.mxu0 %v392
    %556 = vmatprep.subr.bf16.mxu0 0
    %557 = vmatpush1.bf16.msra.mxu0 %v391
    %558 = vmatprep.subr.bf16.mxu0 0
    %559 = vmatpush1.bf16.msra.mxu0 %v390
    %560 = vmatprep.subr.bf16.mxu0 0
    %561 = vmatpush1.bf16.msra.mxu0 %v389
    %562 = vmatprep.subr.bf16.mxu0 0
    %563 = vmatpush1.bf16.msra.mxu0 %v388
    %564 = vmatprep.subr.bf16.mxu0 0
    %565 = vmatpush1.bf16.msra.mxu0 %v387
    %566 = vmatprep.subr.bf16.mxu0 0
    %567 = vmatpush2.bf16.msra.mxu0 0
    %568 = vmatprep.subr.bf16.mxu0 0
    %569 = vmatpush2.bf16.msra.mxu0 0
    %570 = vmatprep.subr.bf16.mxu0 0
    %571 = vmatpush2.bf16.msra.mxu0 0
    %572 = vmatprep.subr.bf16.mxu0 0
    %573 = vmatpush2.bf16.msra.mxu0 0
    %574 = vmatprep.subr.bf16.mxu0 0
    %575 = vmatpush2.bf16.msra.mxu0 0
    %576 = vmatprep.subr.bf16.mxu0 0
    %577 = vmatpush2.bf16.msra.mxu0 0
    %578 = vmatprep.subr.bf16.mxu0 0
    %579 = vmatpush2.bf16.msra.mxu0 0
    %580 = vmatprep.subr.bf16.mxu0 0
    %581 = vmatpush2.bf16.msra.mxu0 0
    %582 = vmatprep.mubr.bf16.mxu0 0
    %583 = vmatmul.mubr.bf16.gmra.mxu0 %v549
    %v584 = vpop.f32.mrf.mxu0
    %v585 = vadd.f32 0.0, %v584
    %v586 = vpop.f32.mrf.mxu0
    %v587 = vpop.f32.mrf.mxu0
    %v588 = vadd.f32 0.0, %v587
    %v589 = vpop.f32.mrf.mxu0
    %590 = vdwg.mxu0
    %v591 = vadd.f32 %v547, %v585
    %v592 = vadd.f32 %v548, %v588
    %v593 = vtanh.pop %v591
    %v594 = vtanh.pop %v592
    %s595 = scalar_lea.vmem [#allocation3], 64
    %v596 = vld [vmem:[%s595] sm:$0xff]
    %v597 = vld [vmem:[%s595 + $0x8] sm:$0xff]
    %v598 = vpack.c.bf16 %v594, %v593
    %599 = vmatprep.subr.bf16.mxu0 0
    %600 = vmatpush1.bf16.msra.mxu0 %v394
    %601 = vmatprep.subr.bf16.mxu0 0
    %602 = vmatpush1.bf16.msra.mxu0 %v393
    %603 = vmatprep.subr.bf16.mxu0 0
    %604 = vmatpush1.bf16.msra.mxu0 %v392
    %605 = vmatprep.subr.bf16.mxu0 0
    %606 = vmatpush1.bf16.msra.mxu0 %v391
    %607 = vmatprep.subr.bf16.mxu0 0
    %608 = vmatpush1.bf16.msra.mxu0 %v390
    %609 = vmatprep.subr.bf16.mxu0 0
    %610 = vmatpush1.bf16.msra.mxu0 %v389
    %611 = vmatprep.subr.bf16.mxu0 0
    %612 = vmatpush1.bf16.msra.mxu0 %v388
    %613 = vmatprep.subr.bf16.mxu0 0
    %614 = vmatpush1.bf16.msra.mxu0 %v387
    %615 = vmatprep.subr.bf16.mxu0 0
    %616 = vmatpush2.bf16.msra.mxu0 0
    %617 = vmatprep.subr.bf16.mxu0 0
    %618 = vmatpush2.bf16.msra.mxu0 0
    %619 = vmatprep.subr.bf16.mxu0 0
    %620 = vmatpush2.bf16.msra.mxu0 0
    %621 = vmatprep.subr.bf16.mxu0 0
    %622 = vmatpush2.bf16.msra.mxu0 0
    %623 = vmatprep.subr.bf16.mxu0 0
    %624 = vmatpush2.bf16.msra.mxu0 0
    %625 = vmatprep.subr.bf16.mxu0 0
    %626 = vmatpush2.bf16.msra.mxu0 0
    %627 = vmatprep.subr.bf16.mxu0 0
    %628 = vmatpush2.bf16.msra.mxu0 0
    %629 = vmatprep.subr.bf16.mxu0 0
    %630 = vmatpush2.bf16.msra.mxu0 0
    %631 = vmatprep.mubr.bf16.mxu0 0
    %632 = vmatmul.mubr.bf16.gmra.mxu0 %v598
    %v633 = vpop.f32.mrf.mxu0
    %v634 = vadd.f32 0.0, %v633
    %v635 = vpop.f32.mrf.mxu0
    %v636 = vpop.f32.mrf.mxu0
    %v637 = vadd.f32 0.0, %v636
    %v638 = vpop.f32.mrf.mxu0
    %639 = vdwg.mxu0
    %v640 = vadd.f32 %v596, %v634
    %v641 = vadd.f32 %v597, %v637
    %v642 = vtanh.pop %v640
    %v643 = vtanh.pop %v641
    %s644 = scalar_lea.vmem [#allocation3], 80
    %v645 = vld [vmem:[%s644] sm:$0xff]
    %v646 = vld [vmem:[%s644 + $0x8] sm:$0xff]
    %v647 = vpack.c.bf16 %v643, %v642
    %648 = vmatprep.subr.bf16.mxu0 0
    %649 = vmatpush1.bf16.msra.mxu0 %v394
    %650 = vmatprep.subr.bf16.mxu0 0
    %651 = vmatpush1.bf16.msra.mxu0 %v393
    %652 = vmatprep.subr.bf16.mxu0 0
    %653 = vmatpush1.bf16.msra.mxu0 %v392
    %654 = vmatprep.subr.bf16.mxu0 0
    %655 = vmatpush1.bf16.msra.mxu0 %v391
    %656 = vmatprep.subr.bf16.mxu0 0
    %657 = vmatpush1.bf16.msra.mxu0 %v390
    %658 = vmatprep.subr.bf16.mxu0 0
    %659 = vmatpush1.bf16.msra.mxu0 %v389
    %660 = vmatprep.subr.bf16.mxu0 0
    %661 = vmatpush1.bf16.msra.mxu0 %v388
    %662 = vmatprep.subr.bf16.mxu0 0
    %663 = vmatpush1.bf16.msra.mxu0 %v387
    %664 = vmatprep.subr.bf16.mxu0 0
    %665 = vmatpush2.bf16.msra.mxu0 0
    %666 = vmatprep.subr.bf16.mxu0 0
    %667 = vmatpush2.bf16.msra.mxu0 0
    %668 = vmatprep.subr.bf16.mxu0 0
    %669 = vmatpush2.bf16.msra.mxu0 0
    %670 = vmatprep.subr.bf16.mxu0 0
    %671 = vmatpush2.bf16.msra.mxu0 0
    %672 = vmatprep.subr.bf16.mxu0 0
    %673 = vmatpush2.bf16.msra.mxu0 0
    %674 = vmatprep.subr.bf16.mxu0 0
    %675 = vmatpush2.bf16.msra.mxu0 0
    %676 = vmatprep.subr.bf16.mxu0 0
    %677 = vmatpush2.bf16.msra.mxu0 0
    %678 = vmatprep.subr.bf16.mxu0 0
    %679 = vmatpush2.bf16.msra.mxu0 0
    %680 = vmatprep.mubr.bf16.mxu0 0
    %681 = vmatmul.mubr.bf16.gmra.mxu0 %v647
    %v682 = vpop.f32.mrf.mxu0
    %v683 = vadd.f32 0.0, %v682
    %v684 = vpop.f32.mrf.mxu0
    %v685 = vpop.f32.mrf.mxu0
    %v686 = vadd.f32 0.0, %v685
    %v687 = vpop.f32.mrf.mxu0
    %688 = vdwg.mxu0
    %v689 = vadd.f32 %v645, %v683
    %v690 = vadd.f32 %v646, %v686
    %v691 = vtanh.pop %v689
    %v692 = vtanh.pop %v690
    %s693 = scalar_lea.vmem [#allocation3], 96
    %v694 = vld [vmem:[%s693] sm:$0xff]
    %v695 = vld [vmem:[%s693 + $0x8] sm:$0xff]
    %v696 = vpack.c.bf16 %v692, %v691
    %697 = vmatprep.subr.bf16.mxu0 0
    %698 = vmatpush1.bf16.msra.mxu0 %v394
    %699 = vmatprep.subr.bf16.mxu0 0
    %700 = vmatpush1.bf16.msra.mxu0 %v393
    %701 = vmatprep.subr.bf16.mxu0 0
    %702 = vmatpush1.bf16.msra.mxu0 %v392
    %703 = vmatprep.subr.bf16.mxu0 0
    %704 = vmatpush1.bf16.msra.mxu0 %v391
    %705 = vmatprep.subr.bf16.mxu0 0
    %706 = vmatpush1.bf16.msra.mxu0 %v390
    %707 = vmatprep.subr.bf16.mxu0 0
    %708 = vmatpush1.bf16.msra.mxu0 %v389
    %709 = vmatprep.subr.bf16.mxu0 0
    %710 = vmatpush1.bf16.msra.mxu0 %v388
    %711 = vmatprep.subr.bf16.mxu0 0
    %712 = vmatpush1.bf16.msra.mxu0 %v387
    %713 = vmatprep.subr.bf16.mxu0 0
    %714 = vmatpush2.bf16.msra.mxu0 0
    %715 = vmatprep.subr.bf16.mxu0 0
    %716 = vmatpush2.bf16.msra.mxu0 0
    %717 = vmatprep.subr.bf16.mxu0 0
    %718 = vmatpush2.bf16.msra.mxu0 0
    %719 = vmatprep.subr.bf16.mxu0 0
    %720 = vmatpush2.bf16.msra.mxu0 0
    %721 = vmatprep.subr.bf16.mxu0 0
    %722 = vmatpush2.bf16.msra.mxu0 0
    %723 = vmatprep.subr.bf16.mxu0 0
    %724 = vmatpush2.bf16.msra.mxu0 0
    %725 = vmatprep.subr.bf16.mxu0 0
    %726 = vmatpush2.bf16.msra.mxu0 0
    %727 = vmatprep.subr.bf16.mxu0 0
    %728 = vmatpush2.bf16.msra.mxu0 0
    %729 = vmatprep.mubr.bf16.mxu0 0
    %730 = vmatmul.mubr.bf16.gmra.mxu0 %v696
    %v731 = vpop.f32.mrf.mxu0
    %v732 = vadd.f32 0.0, %v731
    %v733 = vpop.f32.mrf.mxu0
    %v734 = vpop.f32.mrf.mxu0
    %v735 = vadd.f32 0.0, %v734
    %v736 = vpop.f32.mrf.mxu0
    %737 = vdwg.mxu0
    %v738 = vadd.f32 %v694, %v732
    %v739 = vadd.f32 %v695, %v735
    %v740 = vtanh.pop %v738
    %v741 = vtanh.pop %v739
    %s742 = scalar_lea.vmem [#allocation3], 112
    %v743 = vld [vmem:[%s742] sm:$0xff]
    %v744 = vld [vmem:[%s742 + $0x8] sm:$0xff]
    %v745 = vpack.c.bf16 %v741, %v740
    %746 = vmatprep.subr.bf16.mxu0 0
    %747 = vmatpush1.bf16.msra.mxu0 %v394
    %748 = vmatprep.subr.bf16.mxu0 0
    %749 = vmatpush1.bf16.msra.mxu0 %v393
    %750 = vmatprep.subr.bf16.mxu0 0
    %751 = vmatpush1.bf16.msra.mxu0 %v392
    %752 = vmatprep.subr.bf16.mxu0 0
    %753 = vmatpush1.bf16.msra.mxu0 %v391
    %754 = vmatprep.subr.bf16.mxu0 0
    %755 = vmatpush1.bf16.msra.mxu0 %v390
    %756 = vmatprep.subr.bf16.mxu0 0
    %757 = vmatpush1.bf16.msra.mxu0 %v389
    %758 = vmatprep.subr.bf16.mxu0 0
    %759 = vmatpush1.bf16.msra.mxu0 %v388
    %760 = vmatprep.subr.bf16.mxu0 0
    %761 = vmatpush1.bf16.msra.mxu0 %v387
    %762 = vmatprep.subr.bf16.mxu0 0
    %763 = vmatpush2.bf16.msra.mxu0 0
    %764 = vmatprep.subr.bf16.mxu0 0
    %765 = vmatpush2.bf16.msra.mxu0 0
    %766 = vmatprep.subr.bf16.mxu0 0
    %767 = vmatpush2.bf16.msra.mxu0 0
    %768 = vmatprep.subr.bf16.mxu0 0
    %769 = vmatpush2.bf16.msra.mxu0 0
    %770 = vmatprep.subr.bf16.mxu0 0
    %771 = vmatpush2.bf16.msra.mxu0 0
    %772 = vmatprep.subr.bf16.mxu0 0
    %773 = vmatpush2.bf16.msra.mxu0 0
    %774 = vmatprep.subr.bf16.mxu0 0
    %775 = vmatpush2.bf16.msra.mxu0 0
    %776 = vmatprep.subr.bf16.mxu0 0
    %777 = vmatpush2.bf16.msra.mxu0 0
    %778 = vmatprep.mubr.bf16.mxu0 0
    %779 = vmatmul.mubr.bf16.gmra.mxu0 %v745
    %v780 = vpop.f32.mrf.mxu0
    %v781 = vadd.f32 0.0, %v780
    %v782 = vpop.f32.mrf.mxu0
    %v783 = vpop.f32.mrf.mxu0
    %v784 = vadd.f32 0.0, %v783
    %v785 = vpop.f32.mrf.mxu0
    %786 = vdwg.mxu0
    %v787 = vadd.f32 %v743, %v781
    %v788 = vadd.f32 %v744, %v784
    %v789 = vtanh.pop %v787
    %v790 = vtanh.pop %v788
    %791 = vst [vmem:[#allocation2] sm:$0xff] %v789
    %792 = vst [vmem:[#allocation2 + $0x8] sm:$0xff] %v790
    // Predicated region
    $region46: #{tpu_custom_call.1} parent=1 // pred_check
      %p793 = pneg %p80
    $region47: #{tpu_custom_call.1} parent=1 // pred_check_branch
      %795 = sbr.rel (%p793) target = $region49
    $region48: #{tpu_custom_call.1} parent=1 // pred_region
      %v796 = vpack.c.bf16 %v790, %v789
      %v797 = vld [vmem:[#allocation10] sm:$0xf]
      %v798 = vld [vmem:[#allocation10 + $0x4] sm:$0xf]
      %v799 = vld [vmem:[#allocation10 + $0x8] sm:$0xf]
      %v800 = vld [vmem:[#allocation10 + $0xc] sm:$0xf]
      %v801 = vld [vmem:[#allocation10 + $0x10] sm:$0xf]
      %v802 = vld [vmem:[#allocation10 + $0x14] sm:$0xf]
      %v803 = vld [vmem:[#allocation10 + $0x18] sm:$0xf]
      %v804 = vld [vmem:[#allocation10 + $0x1c] sm:$0xf]
      %v805 = vld [vmem:[#allocation10 + $0x20] sm:$0xf]
      %v806 = vld [vmem:[#allocation10 + $0x24] sm:$0xf]
      %v807 = vld [vmem:[#allocation10 + $0x28] sm:$0xf]
      %v808 = vld [vmem:[#allocation10 + $0x2c] sm:$0xf]
      %v809 = vld [vmem:[#allocation10 + $0x30] sm:$0xf]
      %v810 = vld [vmem:[#allocation10 + $0x34] sm:$0xf]
      %v811 = vld [vmem:[#allocation10 + $0x38] sm:$0xf]
      %v812 = vld [vmem:[#allocation10 + $0x3c] sm:$0xf]
      %v813 = vld [vmem:[%s5] sm:$0x1]
      %v815 = vlaneseq
      %v816 = vshrl.u32 %v815, 7
      %v817 = vsub.s32 0, %v816
      %v818 = vrot.slane %v813, %v817
      %v836 = vunpack.c.l.b16 %v797
      %v837 = vunpack.c.l.b16 %v798
      %v838 = vunpack.c.l.b16 %v799
      %v839 = vunpack.c.l.b16 %v800
      %v840 = vunpack.c.l.b16 %v801
      %v841 = vunpack.c.l.b16 %v802
      %v842 = vunpack.c.l.b16 %v803
      %v843 = vunpack.c.l.b16 %v804
      %v844 = vunpack.c.l.b16 %v805
      %v845 = vunpack.c.l.b16 %v806
      %v846 = vunpack.c.l.b16 %v807
      %v847 = vunpack.c.l.b16 %v808
      %v848 = vunpack.c.l.b16 %v809
      %v849 = vunpack.c.l.b16 %v810
      %v850 = vunpack.c.l.b16 %v811
      %v851 = vunpack.c.l.b16 %v812
      %v852 = vpack.c.b16 %v837, %v836
      %v853 = vpack.c.b16 %v839, %v838
      %v854 = vpack.c.b16 %v841, %v840
      %v855 = vpack.c.b16 %v843, %v842
      %v856 = vpack.c.b16 %v845, %v844
      %v857 = vpack.c.b16 %v847, %v846
      %v858 = vpack.c.b16 %v849, %v848
      %v859 = vpack.c.b16 %v851, %v850
      %868 = vmatprep.subr.bf16.mxu0 0
      %869 = vmatpush1.bf16.msra.mxu0 %v859
      %870 = vmatprep.subr.bf16.mxu0 0
      %871 = vmatpush1.bf16.msra.mxu0 %v858
      %872 = vmatprep.subr.bf16.mxu0 0
      %873 = vmatpush1.bf16.msra.mxu0 %v857
      %874 = vmatprep.subr.bf16.mxu0 0
      %875 = vmatpush1.bf16.msra.mxu0 %v856
      %876 = vmatprep.subr.bf16.mxu0 0
      %877 = vmatpush1.bf16.msra.mxu0 %v855
      %878 = vmatprep.subr.bf16.mxu0 0
      %879 = vmatpush1.bf16.msra.mxu0 %v854
      %880 = vmatprep.subr.bf16.mxu0 0
      %881 = vmatpush1.bf16.msra.mxu0 %v853
      %882 = vmatprep.subr.bf16.mxu0 0
      %883 = vmatpush1.bf16.msra.mxu0 %v852
      %884 = vmatprep.subr.bf16.mxu0 0
      %885 = vmatpush2.bf16.msra.mxu0 0
      %886 = vmatprep.subr.bf16.mxu0 0
      %887 = vmatpush2.bf16.msra.mxu0 0
      %888 = vmatprep.subr.bf16.mxu0 0
      %889 = vmatpush2.bf16.msra.mxu0 0
      %890 = vmatprep.subr.bf16.mxu0 0
      %891 = vmatpush2.bf16.msra.mxu0 0
      %892 = vmatprep.subr.bf16.mxu0 0
      %893 = vmatpush2.bf16.msra.mxu0 0
      %894 = vmatprep.subr.bf16.mxu0 0
      %895 = vmatpush2.bf16.msra.mxu0 0
      %896 = vmatprep.subr.bf16.mxu0 0
      %897 = vmatpush2.bf16.msra.mxu0 0
      %898 = vmatprep.subr.bf16.mxu0 0
      %899 = vmatpush2.bf16.msra.mxu0 0
      %900 = vmatprep.mubr.bf16.mxu0 0
      %901 = vmatmul.mubr.bf16.gmra.mxu0 %v796
      %v902 = vpop.f32.mrf.mxu0
      %v903 = vadd.f32 %v818, %v902
      %v904 = vpop.f32.mrf.mxu0
      %v905 = vpop.f32.mrf.mxu0
      %v906 = vadd.f32 %v818, %v905
      %v907 = vpop.f32.mrf.mxu0
      %908 = vdwg.mxu0
      %909 = vmax.xlane.f32.xlu0 %v903
      %v910 = vpop.xlane.xlu0 %909
      %911 = vmax.xlane.f32.xlu0 %v906
      %v912 = vpop.xlane.xlu0 %911
      %v913 = vsub.f32 %v903, %v910
      %v914 = vsub.f32 %v906, %v912
      %v915 = vmul.f32 %v913, 1.442695
      %v916 = vpow.pop %v915
      %v917 = vmul.f32 %v914, 1.442695
      %v918 = vpow.pop %v917
      %919 = vadd.xlane.f32.xlu0 %v916
      %v920 = vpop.xlane.xlu0 %919
      %921 = vadd.xlane.f32.xlu0 %v918
      %v922 = vpop.xlane.xlu0 %921
      %v923 = vrcp.pop %v920
      %v924 = vrcp.pop %v922
      %v925 = vmul.f32 %v916, %v923
      %v926 = vmul.f32 %v918, %v924
      %927 = vst [vmem:[#allocation12] sm:$0xff] %v925
      %928 = vst [vmem:[#allocation12 + $0x8] sm:$0xff] %v926
    $region49: #{tpu_custom_call.1} parent=1 // pred_fallthru
      _
    // Predicated region
    $region50: #{tpu_custom_call.1} parent=1 // pred_check
      _
    $region51: #{tpu_custom_call.1} parent=1 // pred_check_branch
      %930 = sbr.rel (0) target = $region53
    $region52: #{tpu_custom_call.1} parent=1 // pred_region
      %s932 = ssub.s32 256, 256
      %933 = vsyncadd [#allocation6], %s932
      %s934 = sshll.u32 [#allocation12], 4
      %s935 = int_to_ptr.vmem [resolvable:$true] %s934
      %940 = dma.vmem_to_hbm [thread:$0]  %s935, 256, %s6, [#allocation6], 128, 128, 8
    $region53: #{tpu_custom_call.1} parent=1 // pred_fallthru
      _
    // Predicated region
    $region54: #{tpu_custom_call.1} parent=1 // pred_check
      _
    $region55: #{tpu_custom_call.1} parent=1 // pred_check_branch
      %942 = sbr.rel (0) target = $region57
    $region56: #{tpu_custom_call.1} parent=1 // pred_region
      %943 = dma.done [#allocation6], 256
    $region57: #{tpu_custom_call.1} parent=1 // pred_fallthru
      _
    %944 = vsyncpa [#allocation5], 1
    %945 = vsyncpa [#allocation8], 1
    %946 = vsyncpa [#allocation11], 1
    %947 = vsyncpa [#allocation6], 1

</llo_original>
